<compile_context>
chip_gen: v7x
topology: tpu7x:2x2x1
jax: 0.10.0
libtpu: 0.0.40
codegen_flags: <defaults>
</compile_context>

<pallas_src>
import functools

import jax
import jax.numpy as jnp
from jax import lax
from jax.experimental import pallas as pl
from jax.experimental.pallas import tpu as pltpu

LANES = 128
SUBLANES = 8
PER_INPUT_BUFFER_BYTES = 4 << 20   # 4 MiB per input per pipeline buffer


def _round_up(a, b):
    return ((a + b - 1) // b) * b


def _tversky_partial_kernel(x_ref, t_ref, out_ref, *, block_rows, last_rows, ragged):
    """Lane-dense per-block partials: out[0]=sum(p*t), out[1]=sum(p), out[2]=sum(t)."""
    x = x_ref[...].astype(jnp.float32)
    t = t_ref[...].astype(jnp.float32)
    # tanh-form sigmoid: one EUP tanh + two VALU ops, no exact f32 divide.
    p = 0.5 * (jnp.tanh(0.5 * x) + 1.0)

    def _write(p_, t_):
        tp = jnp.sum(p_ * t_, axis=0, keepdims=True)   # (1, 128)
        sp = jnp.sum(p_, axis=0, keepdims=True)
        st = jnp.sum(t_, axis=0, keepdims=True)
        out_ref[0] = jnp.concatenate([tp, sp, st], axis=0)   # single (3,128) store

    if not ragged:
        _write(p, t)
    else:
        last = pl.num_programs(0) - 1

        @pl.when(pl.program_id(0) != last)
        def _():
            _write(p, t)

        @pl.when(pl.program_id(0) == last)
        def _():
            # Sublane-only row mask, applied ONLY to the final (partial) block.
            # jnp.where is a select, so garbage/NaN rows of the uninitialized
            # part of the VMEM block cannot propagate into the sums.
            row = lax.broadcasted_iota(jnp.int32, (block_rows, 1), 0)
            valid = row < last_rows
            _write(jnp.where(valid, p, 0.0), jnp.where(valid, t, 0.0))


def tversky_loss(inputs, targets, smooth=1, alpha=0.5, beta=0.5):
    """Pallas TPU implementation of TverskyLoss.forward. Returns a scalar f32."""
    x = jnp.reshape(inputs, (-1,))
    t = jnp.reshape(targets, (-1,))
    n = x.shape[0]
    rows = n // LANES
    n_main = rows * LANES

    tp = jnp.float32(0.0)
    sum_p = jnp.float32(0.0)
    sum_t = jnp.float32(0.0)

    if rows > 0:
        # Contiguous-prefix reshape: no full-tensor pad/copy of the big inputs.
        x2d = x[:n_main].reshape(rows, LANES)
        t2d = t[:n_main].reshape(rows, LANES)

        # Block sizing: ~4 MiB per input per pipeline buffer (8192 rows f32,
        # 16384 rows bf16), rounded to a sublane multiple.
        max_itemsize = max(x2d.dtype.itemsize, t2d.dtype.itemsize)
        max_block_rows = max(
            SUBLANES,
            (PER_INPUT_BUFFER_BYTES // (LANES * max_itemsize)) // SUBLANES * SUBLANES)
        block_rows = min(max_block_rows, _round_up(rows, SUBLANES))
        num_blocks = (rows + block_rows - 1) // block_rows
        last_rows = rows - (num_blocks - 1) * block_rows
        ragged = (num_blocks * block_rows) != rows

        kernel = functools.partial(
            _tversky_partial_kernel,
            block_rows=block_rows, last_rows=last_rows, ragged=ragged)

        # Explicit scoped-VMEM budget: 2 pipeline buffers per input + headroom,
        # capped well under v7x's 64 MiB physical VMEM.
        in_bytes_per_step = block_rows * LANES * (x2d.dtype.itemsize + t2d.dtype.itemsize)
        vmem_limit = 2 * in_bytes_per_step + (4 << 20)
        vmem_limit = max(16 << 20, min(vmem_limit, 48 << 20))

        cost = pl.CostEstimate(
            flops=4 * n_main,
            transcendentals=n_main,
            bytes_accessed=n_main * (x2d.dtype.itemsize + t2d.dtype.itemsize)
            + num_blocks * 3 * LANES * 4)

        parts = pl.pallas_call(
            kernel,
            out_shape=jax.ShapeDtypeStruct((num_blocks, 3, LANES), jnp.float32),
            grid_spec=pltpu.PrefetchScalarGridSpec(
                num_scalar_prefetch=0,
                grid=(num_blocks,),
                in_specs=[
                    pl.BlockSpec((block_rows, LANES), lambda i: (i, 0)),
                    pl.BlockSpec((block_rows, LANES), lambda i: (i, 0)),
                ],
                out_specs=pl.BlockSpec((1, 3, LANES), lambda i: (i, 0, 0)),
            ),
            compiler_params=pltpu.CompilerParams(
                dimension_semantics=("parallel",),
                vmem_limit_bytes=vmem_limit),
            cost_estimate=cost,
        )(x2d, t2d)

        sums = jnp.sum(parts, axis=(0, 2))   # (3,) -> [sum(p*t), sum(p), sum(t)]
        tp, sum_p, sum_t = sums[0], sums[1], sums[2]

    if n_main != n:
        # <128-element ragged tail: tiny, handled with plain jnp ops (no pad).
        pt = jax.nn.sigmoid(x[n_main:].astype(jnp.float32))
        tt = t[n_main:].astype(jnp.float32)
        tp = tp + jnp.sum(pt * tt)
        sum_p = sum_p + jnp.sum(pt)
        sum_t = sum_t + jnp.sum(tt)

    fp = sum_p - tp          # sum((1-t)*p) = sum(p) - sum(t*p)
    fn = sum_t - tp          # sum(t*(1-p)) = sum(t) - sum(t*p)
    tversky = (tp + smooth) / (tp + alpha * fp + beta * fn + smooth)
    return (1.0 - tversky).astype(jnp.float32)


def _tversky_loss_ref(inputs, targets, smooth=1, alpha=0.5, beta=0.5):
    p = jax.nn.sigmoid(inputs.astype(jnp.float32)).reshape(-1)
    t = targets.astype(jnp.float32).reshape(-1)
    tp = jnp.sum(p * t)
    fp = jnp.sum((1.0 - t) * p)
    fn = jnp.sum(t * (1.0 - p))
    tversky = (tp + smooth) / (tp + alpha * fp + beta * fn + smooth)
    return 1.0 - tversky


if __name__ == "__main__":
    key = jax.random.PRNGKey(0)
    k1, k2, k3, k4 = jax.random.split(key, 4)

    # NCHW-shaped logits and binary targets (shape only matters up to flatten).
    x = jax.random.normal(k1, (2, 4, 16, 16), dtype=jnp.float32)
    t = (jax.random.uniform(k2, (2, 4, 16, 16)) > 0.5).astype(jnp.float32)
    out = jax.block_until_ready(tversky_loss(x, t))
    ref = jax.block_until_ready(_tversky_loss_ref(x, t))
    assert jnp.allclose(out, ref, rtol=1e-5, atol=1e-5), (out, ref)

    # Ragged case (N=600): exercises the prefix kernel with a partial last
    # block (sublane row mask) plus the <128-element jnp tail path.
    x2 = jax.random.normal(k3, (2, 3, 10, 10), dtype=jnp.float32)
    t2 = (jax.random.uniform(k4, (2, 3, 10, 10)) > 0.5).astype(jnp.float32)
    out2 = jax.block_until_ready(tversky_loss(x2, t2))
    ref2 = jax.block_until_ready(_tversky_loss_ref(x2, t2))
    assert jnp.allclose(out2, ref2, rtol=1e-5, atol=1e-5), (out2, ref2)

    print("KERNEL_OK")
</pallas_src>

<mosaic_0001>
module attributes {stable_mosaic.version = 11 : i64} {
  func.func @_tversky_partial_kernel(%arg0: i32, %arg1: memref<16x128xf32, #tpu.memory_space<vmem>>, %arg2: memref<16x128xf32, #tpu.memory_space<vmem>>, %arg3: memref<1x3x128xf32, #tpu.memory_space<vmem>>) attributes {dimension_semantics = [#tpu.dimension_semantics<parallel>], iteration_bounds = array<i64: 1>, scalar_prefetch = 0 : i64, scratch_operands = 0 : i64, tpu.core_type = #tpu.core_type<tc>, window_params = [{transform_indices = @transform_0, window_bounds = array<i64: 16, 128>}, {transform_indices = @transform_1, window_bounds = array<i64: 16, 128>}, {transform_indices = @transform_2, window_bounds = array<i64: 1, 3, 128>}]} {
    %c0 = arith.constant 0 : index
    %c0_0 = arith.constant 0 : index
    %0 = vector.load %arg1[%c0, %c0_0] : memref<16x128xf32, #tpu.memory_space<vmem>>, vector<16x128xf32>
    %c0_1 = arith.constant 0 : index
    %c0_2 = arith.constant 0 : index
    %1 = vector.load %arg2[%c0_1, %c0_2] : memref<16x128xf32, #tpu.memory_space<vmem>>, vector<16x128xf32>
    %cst = arith.constant 5.000000e-01 : f32
    %2 = vector.broadcast %cst : f32 to vector<16x128xf32>
    %3 = arith.mulf %2, %0 : vector<16x128xf32>
    %4 = math.tanh %3 : vector<16x128xf32>
    %cst_3 = arith.constant 1.000000e+00 : f32
    %5 = vector.broadcast %cst_3 : f32 to vector<16x128xf32>
    %6 = arith.addf %4, %5 : vector<16x128xf32>
    %cst_4 = arith.constant 5.000000e-01 : f32
    %7 = vector.broadcast %cst_4 : f32 to vector<16x128xf32>
    %8 = arith.mulf %7, %6 : vector<16x128xf32>
    %9 = arith.mulf %8, %1 : vector<16x128xf32>
    %cst_5 = arith.constant dense<0.000000e+00> : vector<128xf32>
    %10 = vector.multi_reduction <add>, %9, %cst_5 [0] : vector<16x128xf32> to vector<128xf32>
    %11 = vector.shape_cast %10 : vector<128xf32> to vector<1x128xf32>
    %cst_6 = arith.constant dense<0.000000e+00> : vector<128xf32>
    %12 = vector.multi_reduction <add>, %8, %cst_6 [0] : vector<16x128xf32> to vector<128xf32>
    %13 = vector.shape_cast %12 : vector<128xf32> to vector<1x128xf32>
    %cst_7 = arith.constant dense<0.000000e+00> : vector<128xf32>
    %14 = vector.multi_reduction <add>, %1, %cst_7 [0] : vector<16x128xf32> to vector<128xf32>
    %15 = vector.shape_cast %14 : vector<128xf32> to vector<1x128xf32>
    %16 = tpu.concatenate %11, %13, %15 in 0 : vector<1x128xf32>, vector<1x128xf32>, vector<1x128xf32> -> vector<3x128xf32>
    %c0_8 = arith.constant 0 : index
    %c0_9 = arith.constant 0 : index
    %c0_10 = arith.constant 0 : index
    %17 = vector.load %arg3[%c0_8, %c0_9, %c0_10] : memref<1x3x128xf32, #tpu.memory_space<vmem>>, vector<1x3x128xf32>
    %18 = vector.shape_cast %17 : vector<1x3x128xf32> to vector<3x128xf32>
    %19 = vector.shape_cast %16 : vector<3x128xf32> to vector<1x3x128xf32>
    tpu.vector_store %arg3[%c0_8, %c0_9, %c0_10], %19 {strides = array<i32>} : memref<1x3x128xf32, #tpu.memory_space<vmem>>, vector<1x3x128xf32>,
    return
  }
  func.func @transform_0(%arg0: i32) -> (i32, i32) {
    %c0_i32 = arith.constant 0 : i32
    %c0_i32_0 = arith.constant 0 : i32
    return %arg0, %c0_i32 : i32, i32
  }
  func.func @transform_1(%arg0: i32) -> (i32, i32) {
    %c0_i32 = arith.constant 0 : i32
    %c0_i32_0 = arith.constant 0 : i32
    return %arg0, %c0_i32 : i32, i32
  }
  func.func @transform_2(%arg0: i32) -> (i32, i32, i32) {
    %c0_i32 = arith.constant 0 : i32
    %c0_i32_0 = arith.constant 0 : i32
    %c0_i32_1 = arith.constant 0 : i32
    return %arg0, %c0_i32, %c0_i32_0 : i32, i32, i32
  }
}

</mosaic_0001>

<llo_original>
// kernel: tpu_custom_call.1
$region0: #{tpu_custom_call.1}
  #allocation0 [shape = 'u32[]', space=smem, size = 0x4, offset = 0x4, fixed_abs, tag = 'smem constant byte address 0x4 - core index']
  #allocation1 [shape = 'u32[144,128]{1,0:T(1,128)}', space=vmem, size = 0x12000, scoped, tag = 'internal scratch']
  %s0 = inlined_call_operand.hbm [shape: f32[16,128], index: 0, kind: input, shape index: {}]
  %s1 = inlined_call_operand.hbm [shape: f32[16,128], index: 1, kind: input, shape index: {}]
  %s2 = inlined_call_operand.vmem [shape: f32[1,3,128], index: 2, kind: output, shape index: {}]
  %s3 = sld [smem:[#allocation0]]
  $region26: #{tpu_custom_call.1} parent=0
    _
  %s5 = ssub.s32 1, %s3
  %s6 = scalar_select 0, %s5, %s3
  $region1: #{tpu_custom_call.1} parent=0
    #allocation2 [shape = 'u8[8192]{0}', space=vmem, size = 0x2000, scoped, tag = 'input window, operand 0, single buffered']
    #allocation3 [shape = 's32[1]{0}', space=sflag, size = 0x4, scoped, tag = 'scoped memory for tpu_custom_call.1']
    #allocation4 [shape = 'u8[8192]{0}', space=vmem, size = 0x2000, scoped, tag = 'input window, operand 1, single buffered']
    #allocation5 [shape = 's32[1]{0}', space=sflag, size = 0x4, scoped, tag = 'scoped memory for tpu_custom_call.1']
    %7 = vsyncpa [#allocation3], 0
    %8 = vsyncpa [#allocation5], 0
    // Predicated region
    $region2: #{tpu_custom_call.1} parent=1 // pred_check
      _
    $region3: #{tpu_custom_call.1} parent=1 // pred_check_branch
      %10 = sbr.rel (0) target = $region5
    $region4: #{tpu_custom_call.1} parent=1 // pred_region
      %s12 = ssub.s32 256, 256
      %13 = vsyncadd [#allocation3], %s12
      %s14 = sshll.u32 [#allocation2], 4
      %s15 = int_to_ptr.vmem [resolvable:$true] %s14
      %20 = dma.hbm_to_vmem [thread:$0]  %s0, 256, %s15, [#allocation3], 128, 128, 8
    $region5: #{tpu_custom_call.1} parent=1 // pred_fallthru
      _
    // Predicated region
    $region6: #{tpu_custom_call.1} parent=1 // pred_check
      _
    $region7: #{tpu_custom_call.1} parent=1 // pred_check_branch
      %22 = sbr.rel (0) target = $region9
    $region8: #{tpu_custom_call.1} parent=1 // pred_region
      %s24 = ssub.s32 256, 256
      %25 = vsyncadd [#allocation5], %s24
      %s26 = sshll.u32 [#allocation4], 4
      %s27 = int_to_ptr.vmem [resolvable:$true] %s26
      %32 = dma.hbm_to_vmem [thread:$0]  %s1, 256, %s27, [#allocation5], 128, 128, 8
    $region9: #{tpu_custom_call.1} parent=1 // pred_fallthru
      _
    // Predicated region
    $region10: #{tpu_custom_call.1} parent=1 // pred_check
      _
    $region11: #{tpu_custom_call.1} parent=1 // pred_check_branch
      %34 = sbr.rel (0) target = $region13
    $region12: #{tpu_custom_call.1} parent=1 // pred_region
      %35 = dma.done [#allocation3], 256
    $region13: #{tpu_custom_call.1} parent=1 // pred_fallthru
      _
    // Predicated region
    $region14: #{tpu_custom_call.1} parent=1 // pred_check
      _
    $region15: #{tpu_custom_call.1} parent=1 // pred_check_branch
      %37 = sbr.rel (0) target = $region17
    $region16: #{tpu_custom_call.1} parent=1 // pred_region
      %38 = dma.done [#allocation5], 256
    $region17: #{tpu_custom_call.1} parent=1 // pred_fallthru
      _
    %v39 = vld [vmem:[#allocation2] sm:$0xff]
    %v40 = vld [vmem:[#allocation2 + $0x8] sm:$0xff]
    %v41 = vld [vmem:[#allocation4] sm:$0xff]
    %v42 = vld [vmem:[#allocation4 + $0x8] sm:$0xff]
    %v43 = vmul.f32 %v39, 0.5
    %v44 = vmul.f32 %v40, 0.5
    %v45 = vtanh.pop %v43
    %v46 = vtanh.pop %v44
    %v47 = vadd.f32 %v45, 1.0
    %v48 = vadd.f32 %v46, 1.0
    %v49 = vmul.f32 %v47, 0.5
    %v50 = vmul.f32 %v48, 0.5
    %v51 = vmul.f32 %v49, %v41
    %v52 = vmul.f32 %v50, %v42
    %v53 = vadd.f32 %v51, %v52
    %v54 = vrot.slane %v53, 4
    %v55 = vadd.f32 %v53, %v54
    %v56 = vrot.slane %v55, 2
    %v57 = vadd.f32 %v55, %v56
    %v58 = vrot.slane %v57, 1
    %v59 = vadd.f32 %v57, %v58
    %v60 = vadd.f32 %v49, %v50
    %v61 = vrot.slane %v60, 4
    %v62 = vadd.f32 %v60, %v61
    %v63 = vrot.slane %v62, 2
    %v64 = vadd.f32 %v62, %v63
    %v65 = vrot.slane %v64, 1
    %v66 = vadd.f32 %v64, %v65
    %v67 = vadd.f32 %v41, %v42
    %v68 = vrot.slane %v67, 4
    %v69 = vadd.f32 %v67, %v68
    %v70 = vrot.slane %v69, 2
    %v71 = vadd.f32 %v69, %v70
    %v72 = vrot.slane %v71, 1
    %v73 = vadd.f32 %v71, %v72
    %vm74 = vcmask 1040384
    %v75 = vsel %vm74, %v59, %v66
    %vm76 = vcmask 1041408
    %v77 = vsel %vm76, %v75, %v73
    %78 = vst [vmem:[%s2] sm:$0x7] %v77
    // Predicated region
    $region18: #{tpu_custom_call.1} parent=1 // pred_check
      _
    $region19: #{tpu_custom_call.1} parent=1 // pred_check_branch
      %80 = sbr.rel (0) target = $region21
    $region20: #{tpu_custom_call.1} parent=1 // pred_region
      _
    $region21: #{tpu_custom_call.1} parent=1 // pred_fallthru
      _
    // Predicated region
    $region22: #{tpu_custom_call.1} parent=1 // pred_check
      _
    $region23: #{tpu_custom_call.1} parent=1 // pred_check_branch
      %82 = sbr.rel (0) target = $region25
    $region24: #{tpu_custom_call.1} parent=1 // pred_region
      _
    $region25: #{tpu_custom_call.1} parent=1 // pred_fallthru
      _
    %83 = vsyncpa [#allocation3], 1
    %84 = vsyncpa [#allocation5], 1

</llo_original>
